<compile_context>
chip_gen: v6e
topology: v6e:2x2x1
jax: 0.10.0
libtpu: 0.0.40
codegen_flags: <defaults>
</compile_context>

<pallas_src>
import math

import jax
import jax.numpy as jnp
from jax.experimental import pallas as pl
from jax.experimental.pallas import tpu as pltpu


# ----------------------------------------------------------------------------
# Pallas kernel: one (row-tile, contraction-tile) step of the forward
# ----------------------------------------------------------------------------
def _la_combined_kernel(adj_ref, x_ref, q_ref, src_ref, p_ref, ba_ref,
                        p_out_ref, acc_ref):
    """
    adj_ref   : [TM, TN]  normalized-adjacency tile (rows = destination nodes)
    x_ref     : [TN, F]   tile of x = q @ (W + W^T)  (hoisted, per-step GEMM)
    q_ref     : [TM, F]   q row tile (for the a * q term)   -- resident over k
    src_ref   : [TM, F]   source row tile                   -- resident over k
    p_ref     : [TM, F]   p row tile                        -- resident over k
    ba_ref    : [2,  F]   stacked (mp_bias, a)              -- resident
    p_out_ref : [TM, F]   new p row tile
    acc_ref   : [TM, F]   f32 accumulator scratch
    """
    k = pl.program_id(1)

    @pl.when(k == 0)
    def _():
        acc_ref[...] = jnp.zeros_like(acc_ref)

    # message-passing aggregation for this row tile (MXU, f32 accumulation)
    acc_ref[...] += jnp.dot(adj_ref[...], x_ref[...],
                            preferred_element_type=jnp.float32)

    @pl.when(k == pl.num_programs(1) - 1)
    def _():
        bias = ba_ref[0:1, :].astype(jnp.float32)
        a = ba_ref[1:2, :].astype(jnp.float32)
        q_prime = (acc_ref[...] + bias
                   + a * q_ref[...].astype(jnp.float32)
                   + src_ref[...].astype(jnp.float32))
        p_out_ref[...] = (p_ref[...].astype(jnp.float32)
                          + jnp.tanh(q_prime)).astype(p_out_ref.dtype)


# ----------------------------------------------------------------------------
# One-time precomputation (outside the per-step hot path)
# ----------------------------------------------------------------------------
def precompute_params(weight, mp_bias, a):
    """One-time parameter prep: W_sym = W + W^T and stacked (mp_bias, a)."""
    f = weight.shape[0]
    w_sym = (weight + weight.T).astype(jnp.float32)
    ba = jnp.stack([mp_bias.reshape(f), a.reshape(f)], axis=0).astype(jnp.float32)
    return w_sym, ba


def precompute_normalized_adjacency(edge_index, num_nodes, dtype=jnp.bfloat16):
    """Dense symmetric-normalized adjacency (one-time, graph is static).

    Matches SymplecticMessagePassing: degree counted at `col` (destination),
    no self-loops, out[col] += deg_inv_sqrt[row] * deg_inv_sqrt[col] * x[row].
    Accumulated in f32, cast ONCE to the matmul dtype (bf16 by default).
    """
    row = edge_index[0]
    col = edge_index[1]
    deg = jnp.zeros((num_nodes,), jnp.float32).at[col].add(1.0)
    deg_inv_sqrt = jnp.where(deg > 0, jax.lax.rsqrt(jnp.maximum(deg, 1.0)), 0.0)
    norm = deg_inv_sqrt[row] * deg_inv_sqrt[col]
    adj = jnp.zeros((num_nodes, num_nodes), jnp.float32).at[col, row].add(norm)
    # TODO(synk): for genuinely sparse graphs, replace the dense O(N^2) matrix
    # with block-sparse tiles + scalar-prefetched block indices
    # (PrefetchScalarGridSpec num_scalar_prefetch > 0) so traffic is O(E*F).
    return adj.astype(dtype)


# ----------------------------------------------------------------------------
# VMEM-budgeted tile selection
# ----------------------------------------------------------------------------
def _vmem_bytes(tm, tn, F, adj_b, x_b, io_b, out_b):
    return (2 * tm * tn * adj_b        # adj tile (double-buffered)
            + 2 * tn * F * x_b         # x tile
            + 2 * 3 * tm * F * io_b    # q, source, p tiles
            + 2 * tm * F * out_b       # output tile
            + tm * F * 4               # f32 accumulator scratch
            + 2 * 2 * F * 4)           # (bias, a)


def _choose_tiles(N, F, adj_b, x_b, io_b, out_b, vmem_budget):
    # contraction tile: multiple of 128 (since N is), capped so (tn,F) x-tile
    # and (tm,tn) adj-tile stay modest even for very large N (v7x 64 MiB/TC).
    tn = math.gcd(N, 1024)
    budget = int(0.7 * vmem_budget)
    for tm in (c for c in (2048, 1024, 512, 256, 128) if c <= N and N % c == 0):
        if _vmem_bytes(tm, tn, F, adj_b, x_b, io_b, out_b) <= budget:
            return tm, tn
    return 128, tn                      # conservative fallback


# ----------------------------------------------------------------------------
# Hot-path wrapper: one XLA GEMM + one pallas_call per step
# ----------------------------------------------------------------------------
def la_combined_up_source(p, q, source, adj_norm, w_sym, ba, *,
                          vmem_budget_bytes=32 * 1024 * 1024,
                          adj_buffer_count=2):
    """JAX forward mirroring LACombinedUpSource.forward. Returns (p_new, q)."""
    N, F = q.shape
    assert F % 128 == 0, "F must be a multiple of 128 (lane-dense stores)"
    assert N % 128 == 0, "N must be a multiple of 128"
    assert adj_norm.shape == (N, N)

    mm_dtype = adj_norm.dtype
    # Hoisted per-step GEMM: x = q @ (W + W^T), f32 accumulation, cast once to
    # the adjacency/matmul dtype so the in-kernel dot is homogeneous (bf16).
    x = jnp.dot(q.astype(jnp.float32), w_sym,
                preferred_element_type=jnp.float32).astype(mm_dtype)

    adj_b = adj_norm.dtype.itemsize
    io_b = max(q.dtype.itemsize, source.dtype.itemsize, p.dtype.itemsize)
    out_b = p.dtype.itemsize
    tm, tn = _choose_tiles(N, F, adj_b, adj_b, io_b, out_b, vmem_budget_bytes)
    assert tm % 8 == 0 and tn % 128 == 0

    adj_kwargs = {}
    if adj_buffer_count != 2:
        # deeper buffering for v5e if profiling shows exposed adjacency DMA
        adj_kwargs["pipeline_mode"] = pl.Buffered(adj_buffer_count)

    grid = (N // tm, N // tn)
    p_new = pl.pallas_call(
        _la_combined_kernel,
        out_shape=jax.ShapeDtypeStruct((N, F), p.dtype),
        grid_spec=pltpu.PrefetchScalarGridSpec(
            num_scalar_prefetch=0,
            grid=grid,
            in_specs=[
                pl.BlockSpec((tm, tn), lambda i, k: (i, k), **adj_kwargs),  # adj
                pl.BlockSpec((tn, F), lambda i, k: (k, 0)),                 # x
                pl.BlockSpec((tm, F), lambda i, k: (i, 0)),                 # q
                pl.BlockSpec((tm, F), lambda i, k: (i, 0)),                 # source
                pl.BlockSpec((tm, F), lambda i, k: (i, 0)),                 # p
                pl.BlockSpec((2, F), lambda i, k: (0, 0)),                  # (bias, a)
            ],
            out_specs=pl.BlockSpec((tm, F), lambda i, k: (i, 0)),
            scratch_shapes=[pltpu.VMEM((tm, F), jnp.float32)],
        ),
        compiler_params=pltpu.CompilerParams(
            dimension_semantics=("parallel", "arbitrary"),
            vmem_limit_bytes=vmem_budget_bytes),
        input_output_aliases={4: 0},   # alias p input buffer to p_new output
    )(adj_norm, x, q, source, p, ba)

    # q passes through unchanged
    return p_new, q


# ----------------------------------------------------------------------------
# Demo / correctness check
# ----------------------------------------------------------------------------
if __name__ == "__main__":
    N = 256   # graph nodes
    F = 128   # feature dim n

    key = jax.random.PRNGKey(0)
    k_w, k_p, k_q, k_s = jax.random.split(key, 4)

    # parameters (mirror the PyTorch __init__)
    bound = 1.0 / math.sqrt(F)                      # kaiming_uniform_(a=sqrt(5))
    weight = jax.random.uniform(k_w, (F, F), jnp.float32, -bound, bound)
    mp_bias = jnp.zeros((F,), jnp.float32)          # SymplecticMessagePassing.bias
    a = jnp.ones((1, F), jnp.float32)               # LACombinedUpSource.a

    p = jax.random.normal(k_p, (N, F), jnp.float32)
    q = jax.random.normal(k_q, (N, F), jnp.float32)
    source = jax.random.normal(k_s, (N, F), jnp.float32)

    # deterministic ring graph (both directions), edge_index shape [2, 2N]
    idx = jnp.arange(N, dtype=jnp.int32)
    row = jnp.concatenate([idx, (idx + 1) % N])
    col = jnp.concatenate([(idx + 1) % N, idx])
    edge_index = jnp.stack([row, col], axis=0)

    # ---- one-time precompute (graph + parameters are static) ----------------
    w_sym, ba = precompute_params(weight, mp_bias, a)
    adj_bf16 = precompute_normalized_adjacency(edge_index, N, jnp.bfloat16)
    adj_f32 = precompute_normalized_adjacency(edge_index, N, jnp.float32)

    step = jax.jit(la_combined_up_source)

    # pure-JAX reference of the original module math (f32)
    x_ref = q @ w_sym
    q_prime_ref = adj_f32 @ x_ref + mp_bias[None, :] + a * q + source
    p_ref = p + jnp.tanh(q_prime_ref)

    # default hot path: bf16 adjacency / bf16 in-kernel matmul (f32 accumulation)
    p_bf16, q_out = step(p, q, source, adj_bf16, w_sym, ba)
    jax.block_until_ready((p_bf16, q_out))
    assert jnp.allclose(p_bf16, p_ref, atol=5e-2, rtol=0.0), "bf16 path mismatch"
    assert jnp.array_equal(q_out, q), "q must pass through unchanged"

    # f32 adjacency path: tighter tolerance
    p_f32, _ = step(p, q, source, adj_f32, w_sym, ba)
    jax.block_until_ready(p_f32)
    assert jnp.allclose(p_f32, p_ref, atol=5e-3, rtol=1e-3), "f32 path mismatch"

    print("KERNEL_OK")
</pallas_src>

<mosaic_0001>
module attributes {stable_mosaic.version = 11 : i64} {
  func.func @_la_combined_kernel(%arg0: i32, %arg1: i32, %arg2: memref<256x256xbf16, #tpu.memory_space<vmem>>, %arg3: memref<256x128xbf16, #tpu.memory_space<vmem>>, %arg4: memref<256x128xf32, #tpu.memory_space<vmem>>, %arg5: memref<256x128xf32, #tpu.memory_space<vmem>>, %arg6: memref<256x128xf32, #tpu.memory_space<vmem>>, %arg7: memref<2x128xf32, #tpu.memory_space<vmem>>, %arg8: memref<256x128xf32, #tpu.memory_space<vmem>>, %arg9: memref<256x128xf32, #tpu.memory_space<vmem>>) attributes {dimension_semantics = [#tpu.dimension_semantics<parallel>, #tpu.dimension_semantics<arbitrary>], iteration_bounds = array<i64: 1, 1>, scalar_prefetch = 0 : i64, scratch_operands = 1 : i64, tpu.core_type = #tpu.core_type<tc>, window_params = [{transform_indices = @transform_0, window_bounds = array<i64: 256, 256>}, {transform_indices = @transform_1, window_bounds = array<i64: 256, 128>}, {transform_indices = @transform_2, window_bounds = array<i64: 256, 128>}, {transform_indices = @transform_3, window_bounds = array<i64: 256, 128>}, {transform_indices = @transform_4, window_bounds = array<i64: 256, 128>}, {pipeline_mode = #tpu.pipeline_mode<synchronous>, transform_indices = @transform_5, window_bounds = array<i64: 2, 128>}, {transform_indices = @transform_6, window_bounds = array<i64: 256, 128>}]} {
    %c0_i32 = arith.constant 0 : i32
    %0 = arith.cmpi eq, %arg1, %c0_i32 : i32
    %1 = arith.extui %0 : i1 to i32
    %c0_i32_0 = arith.constant 0 : i32
    %2 = arith.cmpi ne, %1, %c0_i32_0 : i32
    scf.if %2 {
      %cst_10 = arith.constant 0.000000e+00 : f32
      %12 = vector.broadcast %cst_10 : f32 to vector<256x128xf32>
      %c0_11 = arith.constant 0 : index
      %c0_12 = arith.constant 0 : index
      %13 = vector.load %arg9[%c0_11, %c0_12] : memref<256x128xf32, #tpu.memory_space<vmem>>, vector<256x128xf32>
      tpu.vector_store %arg9[%c0_11, %c0_12], %12 {strides = array<i32>} : memref<256x128xf32, #tpu.memory_space<vmem>>, vector<256x128xf32>,
    } else {
    }
    %c0 = arith.constant 0 : index
    %c0_1 = arith.constant 0 : index
    %3 = vector.load %arg9[%c0, %c0_1] : memref<256x128xf32, #tpu.memory_space<vmem>>, vector<256x128xf32>
    %c0_2 = arith.constant 0 : index
    %c0_3 = arith.constant 0 : index
    %4 = vector.load %arg2[%c0_2, %c0_3] : memref<256x256xbf16, #tpu.memory_space<vmem>>, vector<256x256xbf16>
    %c0_4 = arith.constant 0 : index
    %c0_5 = arith.constant 0 : index
    %5 = vector.load %arg3[%c0_4, %c0_5] : memref<256x128xbf16, #tpu.memory_space<vmem>>, vector<256x128xbf16>
    %cst = arith.constant dense<0.000000e+00> : vector<256x128xf32>
    %6 = tpu.matmul %4, %5, %cst {dimension_numbers = #tpu.dot_dimension_numbers<[1], [0], [0], [1], [0, 0, 1, 1], [], []>} : vector<256x256xbf16>, vector<256x128xbf16>, vector<256x128xf32> -> vector<256x128xf32>
    %7 = arith.addf %3, %6 : vector<256x128xf32>
    %c0_6 = arith.constant 0 : index
    %c0_7 = arith.constant 0 : index
    %8 = vector.load %arg9[%c0_6, %c0_7] : memref<256x128xf32, #tpu.memory_space<vmem>>, vector<256x128xf32>
    tpu.vector_store %arg9[%c0_6, %c0_7], %7 {strides = array<i32>} : memref<256x128xf32, #tpu.memory_space<vmem>>, vector<256x128xf32>,
    %c0_i32_8 = arith.constant 0 : i32
    %9 = arith.cmpi eq, %arg1, %c0_i32_8 : i32
    %10 = arith.extui %9 : i1 to i32
    %c0_i32_9 = arith.constant 0 : i32
    %11 = arith.cmpi ne, %10, %c0_i32_9 : i32
    scf.if %11 {
      %c0_10 = arith.constant 0 : index
      %c0_11 = arith.constant 0 : index
      %12 = vector.load %arg7[%c0_10, %c0_11] : memref<2x128xf32, #tpu.memory_space<vmem>>, vector<1x128xf32>
      %c1 = arith.constant 1 : index
      %c0_12 = arith.constant 0 : index
      %13 = vector.load %arg7[%c1, %c0_12] : memref<2x128xf32, #tpu.memory_space<vmem>>, vector<1x128xf32>
      %c0_13 = arith.constant 0 : index
      %c0_14 = arith.constant 0 : index
      %14 = vector.load %arg9[%c0_13, %c0_14] : memref<256x128xf32, #tpu.memory_space<vmem>>, vector<256x128xf32>
      %15 = vector.broadcast %12 : vector<1x128xf32> to vector<256x128xf32>
      %16 = arith.addf %14, %15 : vector<256x128xf32>
      %c0_15 = arith.constant 0 : index
      %c0_16 = arith.constant 0 : index
      %17 = vector.load %arg4[%c0_15, %c0_16] : memref<256x128xf32, #tpu.memory_space<vmem>>, vector<256x128xf32>
      %18 = vector.broadcast %13 : vector<1x128xf32> to vector<256x128xf32>
      %19 = arith.mulf %18, %17 : vector<256x128xf32>
      %20 = arith.addf %16, %19 : vector<256x128xf32>
      %c0_17 = arith.constant 0 : index
      %c0_18 = arith.constant 0 : index
      %21 = vector.load %arg5[%c0_17, %c0_18] : memref<256x128xf32, #tpu.memory_space<vmem>>, vector<256x128xf32>
      %22 = arith.addf %20, %21 : vector<256x128xf32>
      %c0_19 = arith.constant 0 : index
      %c0_20 = arith.constant 0 : index
      %23 = vector.load %arg6[%c0_19, %c0_20] : memref<256x128xf32, #tpu.memory_space<vmem>>, vector<256x128xf32>
      %24 = math.tanh %22 : vector<256x128xf32>
      %25 = arith.addf %23, %24 : vector<256x128xf32>
      %c0_21 = arith.constant 0 : index
      %c0_22 = arith.constant 0 : index
      %26 = vector.load %arg8[%c0_21, %c0_22] : memref<256x128xf32, #tpu.memory_space<vmem>>, vector<256x128xf32>
      tpu.vector_store %arg8[%c0_21, %c0_22], %25 {strides = array<i32>} : memref<256x128xf32, #tpu.memory_space<vmem>>, vector<256x128xf32>,
    } else {
    }
    return
  }
  func.func @transform_0(%arg0: i32, %arg1: i32) -> (i32, i32) {
    %c0_i32 = arith.constant 0 : i32
    return %arg0, %arg1 : i32, i32
  }
  func.func @transform_1(%arg0: i32, %arg1: i32) -> (i32, i32) {
    %c0_i32 = arith.constant 0 : i32
    %c0_i32_0 = arith.constant 0 : i32
    return %arg1, %c0_i32 : i32, i32
  }
  func.func @transform_2(%arg0: i32, %arg1: i32) -> (i32, i32) {
    %c0_i32 = arith.constant 0 : i32
    %c0_i32_0 = arith.constant 0 : i32
    return %arg0, %c0_i32 : i32, i32
  }
  func.func @transform_3(%arg0: i32, %arg1: i32) -> (i32, i32) {
    %c0_i32 = arith.constant 0 : i32
    %c0_i32_0 = arith.constant 0 : i32
    return %arg0, %c0_i32 : i32, i32
  }
  func.func @transform_4(%arg0: i32, %arg1: i32) -> (i32, i32) {
    %c0_i32 = arith.constant 0 : i32
    %c0_i32_0 = arith.constant 0 : i32
    return %arg0, %c0_i32 : i32, i32
  }
  func.func @transform_5(%arg0: i32, %arg1: i32) -> (i32, i32) {
    %c0_i32 = arith.constant 0 : i32
    %c0_i32_0 = arith.constant 0 : i32
    %c0_i32_1 = arith.constant 0 : i32
    return %c0_i32, %c0_i32_0 : i32, i32
  }
  func.func @transform_6(%arg0: i32, %arg1: i32) -> (i32, i32) {
    %c0_i32 = arith.constant 0 : i32
    %c0_i32_0 = arith.constant 0 : i32
    return %arg0, %c0_i32 : i32, i32
  }
}

</mosaic_0001>

<llo_original>
// kernel: la_combined_up_source.1
$region0: #{la_combined_up_source.1}
  #allocation0 [shape = 'u32[]', space=smem, size = 0x4, offset = 0x4, fixed_abs, tag = 'smem constant byte address 0x4 - core index']
  #allocation1 [shape = 'u32[144,128]{1,0:T(1,128)}', space=vmem, size = 0x12000, scoped, tag = 'internal scratch']
  #allocation2 [shape = 'f32[256,128]{1,0:T(8,128)}', space=vmem, size = 0x20000, scoped, tag = 'scratch operand']
  %s0 = inlined_call_operand.vmem [shape: bf16[256,256], index: 0, kind: input, shape index: {}]
  %s1 = inlined_call_operand.vmem [shape: bf16[256,128], index: 1, kind: input, shape index: {}]
  %s2 = inlined_call_operand.vmem [shape: f32[256,128], index: 2, kind: input, shape index: {}]
  %s3 = inlined_call_operand.vmem [shape: f32[256,128], index: 3, kind: input, shape index: {}]
  %s4 = inlined_call_operand.vmem [shape: f32[256,128], index: 4, kind: input, shape index: {}, may-alias: {4,6}]
  %s5 = inlined_call_operand.hbm [shape: f32[2,128], index: 5, kind: input, shape index: {}]
  %s6 = inlined_call_operand.vmem [shape: f32[256,128], index: 6, kind: output, shape index: {}, may-alias: {4,6}]
  %s7 = sld [smem:[#allocation0]]
  $region46: #{la_combined_up_source.1} parent=0
    _
  %s9 = ssub.s32 1, %s7
  %s10 = scalar_select 0, %s9, %s7
  $region1: #{la_combined_up_source.1} parent=0
    #allocation3 [shape = 'u8[1024]{0}', space=vmem, size = 0x400, scoped, tag = 'input window, operand 5, single buffered']
    #allocation4 [shape = 's32[1]{0}', space=sflag, size = 0x4, scoped, tag = 'scoped memory for la_combined_up_source.1']
    %11 = vsyncpa [#allocation4], 0
    // Predicated region
    $region2: #{la_combined_up_source.1} parent=1 // pred_check
      _
    $region3: #{la_combined_up_source.1} parent=1 // pred_check_branch
      %13 = sbr.rel (0) target = $region5
    $region4: #{la_combined_up_source.1} parent=1 // pred_region
      _
    $region5: #{la_combined_up_source.1} parent=1 // pred_fallthru
      _
    // Predicated region
    $region6: #{la_combined_up_source.1} parent=1 // pred_check
      _
    $region7: #{la_combined_up_source.1} parent=1 // pred_check_branch
      %15 = sbr.rel (0) target = $region9
    $region8: #{la_combined_up_source.1} parent=1 // pred_region
      _
    $region9: #{la_combined_up_source.1} parent=1 // pred_fallthru
      _
    // Predicated region
    $region10: #{la_combined_up_source.1} parent=1 // pred_check
      _
    $region11: #{la_combined_up_source.1} parent=1 // pred_check_branch
      %17 = sbr.rel (0) target = $region13
    $region12: #{la_combined_up_source.1} parent=1 // pred_region
      _
    $region13: #{la_combined_up_source.1} parent=1 // pred_fallthru
      _
    // Predicated region
    $region14: #{la_combined_up_source.1} parent=1 // pred_check
      _
    $region15: #{la_combined_up_source.1} parent=1 // pred_check_branch
      %19 = sbr.rel (0) target = $region17
    $region16: #{la_combined_up_source.1} parent=1 // pred_region
      _
    $region17: #{la_combined_up_source.1} parent=1 // pred_fallthru
      _
    // Predicated region
    $region18: #{la_combined_up_source.1} parent=1 // pred_check
      _
    $region19: #{la_combined_up_source.1} parent=1 // pred_check_branch
      %21 = sbr.rel (0) target = $region21
    $region20: #{la_combined_up_source.1} parent=1 // pred_region
      _
    $region21: #{la_combined_up_source.1} parent=1 // pred_fallthru
      _
    // Predicated region
    $region22: #{la_combined_up_source.1} parent=1 // pred_check
      _
    $region23: #{la_combined_up_source.1} parent=1 // pred_check_branch
      %23 = sbr.rel (0) target = $region25
    $region24: #{la_combined_up_source.1} parent=1 // pred_region
      %s25 = ssub.s32 32, 32
      %26 = vsyncadd [#allocation4], %s25
      %s28 = sshll.u32 [#allocation3], 4
      %s29 = int_to_ptr.vmem [resolvable:$true] %s28
      %31 = dma.hbm_to_vmem [thread:$0]  %s5, 32, %s29, [#allocation4]
    $region25: #{la_combined_up_source.1} parent=1 // pred_fallthru
      _
    // Predicated region
    $region26: #{la_combined_up_source.1} parent=1 // pred_check
      _
    $region27: #{la_combined_up_source.1} parent=1 // pred_check_branch
      %33 = sbr.rel (0) target = $region29
    $region28: #{la_combined_up_source.1} parent=1 // pred_region
      %34 = dma.done [#allocation4], 32
    $region29: #{la_combined_up_source.1} parent=1 // pred_fallthru
      _
    %p36 = scmp.eq.s32.totalorder 0, 0
    // Predicated region
    $region30: #{la_combined_up_source.1} parent=1 // pred_check
      %p37 = pneg %p36
    $region31: #{la_combined_up_source.1} parent=1 // pred_check_branch
      %39 = sbr.rel (%p37) target = $region33
    $region32: #{la_combined_up_source.1} parent=1 // pred_region
      %40 = vst [vmem:[#allocation2] sm:$0xff] 0.0
      %41 = vst [vmem:[#allocation2 + $0x8] sm:$0xff] 0.0
      %42 = vst [vmem:[#allocation2 + $0x10] sm:$0xff] 0.0
      %43 = vst [vmem:[#allocation2 + $0x18] sm:$0xff] 0.0
      %44 = vst [vmem:[#allocation2 + $0x20] sm:$0xff] 0.0
      %45 = vst [vmem:[#allocation2 + $0x28] sm:$0xff] 0.0
      %46 = vst [vmem:[#allocation2 + $0x30] sm:$0xff] 0.0
      %47 = vst [vmem:[#allocation2 + $0x38] sm:$0xff] 0.0
      %48 = vst [vmem:[#allocation2 + $0x40] sm:$0xff] 0.0
      %49 = vst [vmem:[#allocation2 + $0x48] sm:$0xff] 0.0
      %50 = vst [vmem:[#allocation2 + $0x50] sm:$0xff] 0.0
      %51 = vst [vmem:[#allocation2 + $0x58] sm:$0xff] 0.0
      %52 = vst [vmem:[#allocation2 + $0x60] sm:$0xff] 0.0
      %53 = vst [vmem:[#allocation2 + $0x68] sm:$0xff] 0.0
      %54 = vst [vmem:[#allocation2 + $0x70] sm:$0xff] 0.0
      %55 = vst [vmem:[#allocation2 + $0x78] sm:$0xff] 0.0
      %56 = vst [vmem:[#allocation2 + $0x80] sm:$0xff] 0.0
      %57 = vst [vmem:[#allocation2 + $0x88] sm:$0xff] 0.0
      %58 = vst [vmem:[#allocation2 + $0x90] sm:$0xff] 0.0
      %59 = vst [vmem:[#allocation2 + $0x98] sm:$0xff] 0.0
      %60 = vst [vmem:[#allocation2 + $0xa0] sm:$0xff] 0.0
      %61 = vst [vmem:[#allocation2 + $0xa8] sm:$0xff] 0.0
      %62 = vst [vmem:[#allocation2 + $0xb0] sm:$0xff] 0.0
      %63 = vst [vmem:[#allocation2 + $0xb8] sm:$0xff] 0.0
      %64 = vst [vmem:[#allocation2 + $0xc0] sm:$0xff] 0.0
      %65 = vst [vmem:[#allocation2 + $0xc8] sm:$0xff] 0.0
      %66 = vst [vmem:[#allocation2 + $0xd0] sm:$0xff] 0.0
      %67 = vst [vmem:[#allocation2 + $0xd8] sm:$0xff] 0.0
      %68 = vst [vmem:[#allocation2 + $0xe0] sm:$0xff] 0.0
      %69 = vst [vmem:[#allocation2 + $0xe8] sm:$0xff] 0.0
      %70 = vst [vmem:[#allocation2 + $0xf0] sm:$0xff] 0.0
      %71 = vst [vmem:[#allocation2 + $0xf8] sm:$0xff] 0.0
    $region33: #{la_combined_up_source.1} parent=1 // pred_fallthru
      _
    %v72 = vld [vmem:[#allocation2] sm:$0xff]
    %v73 = vld [vmem:[#allocation2 + $0x8] sm:$0xff]
    %v74 = vld [vmem:[#allocation2 + $0x10] sm:$0xff]
    %v75 = vld [vmem:[#allocation2 + $0x18] sm:$0xff]
    %v76 = vld [vmem:[#allocation2 + $0x20] sm:$0xff]
    %v77 = vld [vmem:[#allocation2 + $0x28] sm:$0xff]
    %v78 = vld [vmem:[#allocation2 + $0x30] sm:$0xff]
    %v79 = vld [vmem:[#allocation2 + $0x38] sm:$0xff]
    %v80 = vld [vmem:[#allocation2 + $0x40] sm:$0xff]
    %v81 = vld [vmem:[#allocation2 + $0x48] sm:$0xff]
    %v82 = vld [vmem:[#allocation2 + $0x50] sm:$0xff]
    %v83 = vld [vmem:[#allocation2 + $0x58] sm:$0xff]
    %v84 = vld [vmem:[#allocation2 + $0x60] sm:$0xff]
    %v85 = vld [vmem:[#allocation2 + $0x68] sm:$0xff]
    %v86 = vld [vmem:[#allocation2 + $0x70] sm:$0xff]
    %v87 = vld [vmem:[#allocation2 + $0x78] sm:$0xff]
    %v88 = vld [vmem:[#allocation2 + $0x80] sm:$0xff]
    %v89 = vld [vmem:[#allocation2 + $0x88] sm:$0xff]
    %v90 = vld [vmem:[#allocation2 + $0x90] sm:$0xff]
    %v91 = vld [vmem:[#allocation2 + $0x98] sm:$0xff]
    %v92 = vld [vmem:[#allocation2 + $0xa0] sm:$0xff]
    %v93 = vld [vmem:[#allocation2 + $0xa8] sm:$0xff]
    %v94 = vld [vmem:[#allocation2 + $0xb0] sm:$0xff]
    %v95 = vld [vmem:[#allocation2 + $0xb8] sm:$0xff]
    %v96 = vld [vmem:[#allocation2 + $0xc0] sm:$0xff]
    %v97 = vld [vmem:[#allocation2 + $0xc8] sm:$0xff]
    %v98 = vld [vmem:[#allocation2 + $0xd0] sm:$0xff]
    %v99 = vld [vmem:[#allocation2 + $0xd8] sm:$0xff]
    %v100 = vld [vmem:[#allocation2 + $0xe0] sm:$0xff]
    %v101 = vld [vmem:[#allocation2 + $0xe8] sm:$0xff]
    %v102 = vld [vmem:[#allocation2 + $0xf0] sm:$0xff]
    %v103 = vld [vmem:[#allocation2 + $0xf8] sm:$0xff]
    %v104 = vld [vmem:[%s0] sm:$0xff]
    %v105 = vld [vmem:[%s0 + $0x8] sm:$0xff]
    %v106 = vld [vmem:[%s0 + $0x10] sm:$0xff]
    %v107 = vld [vmem:[%s0 + $0x18] sm:$0xff]
    %v108 = vld [vmem:[%s0 + $0x20] sm:$0xff]
    %v109 = vld [vmem:[%s0 + $0x28] sm:$0xff]
    %v110 = vld [vmem:[%s0 + $0x30] sm:$0xff]
    %v111 = vld [vmem:[%s0 + $0x38] sm:$0xff]
    %v112 = vld [vmem:[%s0 + $0x40] sm:$0xff]
    %v113 = vld [vmem:[%s0 + $0x48] sm:$0xff]
    %v114 = vld [vmem:[%s0 + $0x50] sm:$0xff]
    %v115 = vld [vmem:[%s0 + $0x58] sm:$0xff]
    %v116 = vld [vmem:[%s0 + $0x60] sm:$0xff]
    %v117 = vld [vmem:[%s0 + $0x68] sm:$0xff]
    %v118 = vld [vmem:[%s0 + $0x70] sm:$0xff]
    %v119 = vld [vmem:[%s0 + $0x78] sm:$0xff]
    %v120 = vld [vmem:[%s0 + $0x80] sm:$0xff]
    %v121 = vld [vmem:[%s0 + $0x88] sm:$0xff]
    %v122 = vld [vmem:[%s0 + $0x90] sm:$0xff]
    %v123 = vld [vmem:[%s0 + $0x98] sm:$0xff]
    %v124 = vld [vmem:[%s0 + $0xa0] sm:$0xff]
    %v125 = vld [vmem:[%s0 + $0xa8] sm:$0xff]
    %v126 = vld [vmem:[%s0 + $0xb0] sm:$0xff]
    %v127 = vld [vmem:[%s0 + $0xb8] sm:$0xff]
    %v128 = vld [vmem:[%s0 + $0xc0] sm:$0xff]
    %v129 = vld [vmem:[%s0 + $0xc8] sm:$0xff]
    %v130 = vld [vmem:[%s0 + $0xd0] sm:$0xff]
    %v131 = vld [vmem:[%s0 + $0xd8] sm:$0xff]
    %v132 = vld [vmem:[%s0 + $0xe0] sm:$0xff]
    %v133 = vld [vmem:[%s0 + $0xe8] sm:$0xff]
    %v134 = vld [vmem:[%s0 + $0xf0] sm:$0xff]
    %v135 = vld [vmem:[%s0 + $0xf8] sm:$0xff]
    %v136 = vld [vmem:[%s1] sm:$0xf]
    %v137 = vld [vmem:[%s1 + $0x4] sm:$0xf]
    %v138 = vld [vmem:[%s1 + $0x8] sm:$0xf]
    %v139 = vld [vmem:[%s1 + $0xc] sm:$0xf]
    %v140 = vld [vmem:[%s1 + $0x10] sm:$0xf]
    %v141 = vld [vmem:[%s1 + $0x14] sm:$0xf]
    %v142 = vld [vmem:[%s1 + $0x18] sm:$0xf]
    %v143 = vld [vmem:[%s1 + $0x1c] sm:$0xf]
    %v144 = vld [vmem:[%s1 + $0x20] sm:$0xf]
    %v145 = vld [vmem:[%s1 + $0x24] sm:$0xf]
    %v146 = vld [vmem:[%s1 + $0x28] sm:$0xf]
    %v147 = vld [vmem:[%s1 + $0x2c] sm:$0xf]
    %v148 = vld [vmem:[%s1 + $0x30] sm:$0xf]
    %v149 = vld [vmem:[%s1 + $0x34] sm:$0xf]
    %v150 = vld [vmem:[%s1 + $0x38] sm:$0xf]
    %v151 = vld [vmem:[%s1 + $0x3c] sm:$0xf]
    %v152 = vld [vmem:[%s1 + $0x40] sm:$0xf]
    %v153 = vld [vmem:[%s1 + $0x44] sm:$0xf]
    %v154 = vld [vmem:[%s1 + $0x48] sm:$0xf]
    %v155 = vld [vmem:[%s1 + $0x4c] sm:$0xf]
    %v156 = vld [vmem:[%s1 + $0x50] sm:$0xf]
    %v157 = vld [vmem:[%s1 + $0x54] sm:$0xf]
    %v158 = vld [vmem:[%s1 + $0x58] sm:$0xf]
    %v159 = vld [vmem:[%s1 + $0x5c] sm:$0xf]
    %v160 = vld [vmem:[%s1 + $0x60] sm:$0xf]
    %v161 = vld [vmem:[%s1 + $0x64] sm:$0xf]
    %v162 = vld [vmem:[%s1 + $0x68] sm:$0xf]
    %v163 = vld [vmem:[%s1 + $0x6c] sm:$0xf]
    %v164 = vld [vmem:[%s1 + $0x70] sm:$0xf]
    %v165 = vld [vmem:[%s1 + $0x74] sm:$0xf]
    %v166 = vld [vmem:[%s1 + $0x78] sm:$0xf]
    %v167 = vld [vmem:[%s1 + $0x7c] sm:$0xf]
    %v200 = vunpack.c.l.b16 %v104
    %v201 = vunpack.c.h.b16 %v104
    %v202 = vunpack.c.l.b16 %v105
    %v203 = vunpack.c.h.b16 %v105
    %v204 = vunpack.c.l.b16 %v106
    %v205 = vunpack.c.h.b16 %v106
    %v206 = vunpack.c.l.b16 %v107
    %v207 = vunpack.c.h.b16 %v107
    %v208 = vunpack.c.l.b16 %v108
    %v209 = vunpack.c.h.b16 %v108
    %v210 = vunpack.c.l.b16 %v109
    %v211 = vunpack.c.h.b16 %v109
    %v212 = vunpack.c.l.b16 %v110
    %v213 = vunpack.c.h.b16 %v110
    %v214 = vunpack.c.l.b16 %v111
    %v215 = vunpack.c.h.b16 %v111
    %v216 = vunpack.c.l.b16 %v112
    %v217 = vunpack.c.h.b16 %v112
    %v218 = vunpack.c.l.b16 %v113
    %v219 = vunpack.c.h.b16 %v113
    %v220 = vunpack.c.l.b16 %v114
    %v221 = vunpack.c.h.b16 %v114
    %v222 = vunpack.c.l.b16 %v115
    %v223 = vunpack.c.h.b16 %v115
    %v224 = vunpack.c.l.b16 %v116
    %v225 = vunpack.c.h.b16 %v116
    %v226 = vunpack.c.l.b16 %v117
    %v227 = vunpack.c.h.b16 %v117
    %v228 = vunpack.c.l.b16 %v118
    %v229 = vunpack.c.h.b16 %v118
    %v230 = vunpack.c.l.b16 %v119
    %v231 = vunpack.c.h.b16 %v119
    %v232 = vunpack.c.l.b16 %v120
    %v233 = vunpack.c.h.b16 %v120
    %v234 = vunpack.c.l.b16 %v121
    %v235 = vunpack.c.h.b16 %v121
    %v236 = vunpack.c.l.b16 %v122
    %v237 = vunpack.c.h.b16 %v122
    %v238 = vunpack.c.l.b16 %v123
    %v239 = vunpack.c.h.b16 %v123
    %v240 = vunpack.c.l.b16 %v124
    %v241 = vunpack.c.h.b16 %v124
    %v242 = vunpack.c.l.b16 %v125
    %v243 = vunpack.c.h.b16 %v125
    %v244 = vunpack.c.l.b16 %v126
    %v245 = vunpack.c.h.b16 %v126
    %v246 = vunpack.c.l.b16 %v127
    %v247 = vunpack.c.h.b16 %v127
    %v248 = vunpack.c.l.b16 %v128
    %v249 = vunpack.c.h.b16 %v128
    %v250 = vunpack.c.l.b16 %v129
    %v251 = vunpack.c.h.b16 %v129
    %v252 = vunpack.c.l.b16 %v130
    %v253 = vunpack.c.h.b16 %v130
    %v254 = vunpack.c.l.b16 %v131
    %v255 = vunpack.c.h.b16 %v131
    %v256 = vunpack.c.l.b16 %v132
    %v257 = vunpack.c.h.b16 %v132
    %v258 = vunpack.c.l.b16 %v133
    %v259 = vunpack.c.h.b16 %v133
    %v260 = vunpack.c.l.b16 %v134
    %v261 = vunpack.c.h.b16 %v134
    %v262 = vunpack.c.l.b16 %v135
    %v263 = vunpack.c.h.b16 %v135
    %v264 = vpack.c.b16 %v202, %v200
    %v265 = vpack.c.b16 %v203, %v201
    %v266 = vpack.c.b16 %v206, %v204
    %v267 = vpack.c.b16 %v207, %v205
    %v268 = vpack.c.b16 %v210, %v208
    %v269 = vpack.c.b16 %v211, %v209
    %v270 = vpack.c.b16 %v214, %v212
    %v271 = vpack.c.b16 %v215, %v213
    %v272 = vpack.c.b16 %v218, %v216
    %v273 = vpack.c.b16 %v219, %v217
    %v274 = vpack.c.b16 %v222, %v220
    %v275 = vpack.c.b16 %v223, %v221
    %v276 = vpack.c.b16 %v226, %v224
    %v277 = vpack.c.b16 %v227, %v225
    %v278 = vpack.c.b16 %v230, %v228
    %v279 = vpack.c.b16 %v231, %v229
    %v280 = vpack.c.b16 %v234, %v232
    %v281 = vpack.c.b16 %v235, %v233
    %v282 = vpack.c.b16 %v238, %v236
    %v283 = vpack.c.b16 %v239, %v237
    %v284 = vpack.c.b16 %v242, %v240
    %v285 = vpack.c.b16 %v243, %v241
    %v286 = vpack.c.b16 %v246, %v244
    %v287 = vpack.c.b16 %v247, %v245
    %v288 = vpack.c.b16 %v250, %v248
    %v289 = vpack.c.b16 %v251, %v249
    %v290 = vpack.c.b16 %v254, %v252
    %v291 = vpack.c.b16 %v255, %v253
    %v292 = vpack.c.b16 %v258, %v256
    %v293 = vpack.c.b16 %v259, %v257
    %v294 = vpack.c.b16 %v262, %v260
    %v295 = vpack.c.b16 %v263, %v261
    %v360 = vunpack.c.l.b16 %v136
    %v361 = vunpack.c.l.b16 %v137
    %v362 = vunpack.c.l.b16 %v138
    %v363 = vunpack.c.l.b16 %v139
    %v364 = vunpack.c.l.b16 %v140
    %v365 = vunpack.c.l.b16 %v141
    %v366 = vunpack.c.l.b16 %v142
    %v367 = vunpack.c.l.b16 %v143
    %v368 = vunpack.c.l.b16 %v144
    %v369 = vunpack.c.l.b16 %v145
    %v370 = vunpack.c.l.b16 %v146
    %v371 = vunpack.c.l.b16 %v147
    %v372 = vunpack.c.l.b16 %v148
    %v373 = vunpack.c.l.b16 %v149
    %v374 = vunpack.c.l.b16 %v150
    %v375 = vunpack.c.l.b16 %v151
    %v376 = vunpack.c.l.b16 %v152
    %v377 = vunpack.c.l.b16 %v153
    %v378 = vunpack.c.l.b16 %v154
    %v379 = vunpack.c.l.b16 %v155
    %v380 = vunpack.c.l.b16 %v156
    %v381 = vunpack.c.l.b16 %v157
    %v382 = vunpack.c.l.b16 %v158
    %v383 = vunpack.c.l.b16 %v159
    %v384 = vunpack.c.l.b16 %v160
    %v385 = vunpack.c.l.b16 %v161
    %v386 = vunpack.c.l.b16 %v162
    %v387 = vunpack.c.l.b16 %v163
    %v388 = vunpack.c.l.b16 %v164
    %v389 = vunpack.c.l.b16 %v165
    %v390 = vunpack.c.l.b16 %v166
    %v391 = vunpack.c.l.b16 %v167
    %v392 = vpack.c.b16 %v361, %v360
    %v393 = vpack.c.b16 %v363, %v362
    %v394 = vpack.c.b16 %v365, %v364
    %v395 = vpack.c.b16 %v367, %v366
    %v396 = vpack.c.b16 %v369, %v368
    %v397 = vpack.c.b16 %v371, %v370
    %v398 = vpack.c.b16 %v373, %v372
    %v399 = vpack.c.b16 %v375, %v374
    %v400 = vpack.c.b16 %v377, %v376
    %v401 = vpack.c.b16 %v379, %v378
    %v402 = vpack.c.b16 %v381, %v380
    %v403 = vpack.c.b16 %v383, %v382
    %v404 = vpack.c.b16 %v385, %v384
    %v405 = vpack.c.b16 %v387, %v386
    %v406 = vpack.c.b16 %v389, %v388
    %v407 = vpack.c.b16 %v391, %v390
    %424 = vmatprep.subr.bf16.mxu0 0
    %425 = vmatpush1.bf16.msra.mxu0 %v399
    %426 = vmatprep.subr.bf16.mxu0 0
    %427 = vmatpush1.bf16.msra.mxu0 %v398
    %428 = vmatprep.subr.bf16.mxu0 0
    %429 = vmatpush1.bf16.msra.mxu0 %v397
    %430 = vmatprep.subr.bf16.mxu0 0
    %431 = vmatpush1.bf16.msra.mxu0 %v396
    %432 = vmatprep.subr.bf16.mxu0 0
    %433 = vmatpush1.bf16.msra.mxu0 %v395
    %434 = vmatprep.subr.bf16.mxu0 0
    %435 = vmatpush1.bf16.msra.mxu0 %v394
    %436 = vmatprep.subr.bf16.mxu0 0
    %437 = vmatpush1.bf16.msra.mxu0 %v393
    %438 = vmatprep.subr.bf16.mxu0 0
    %439 = vmatpush1.bf16.msra.mxu0 %v392
    %440 = vmatprep.subr.bf16.mxu0 0
    %441 = vmatpush2.bf16.msra.mxu0 %v407
    %442 = vmatprep.subr.bf16.mxu0 0
    %443 = vmatpush2.bf16.msra.mxu0 %v406
    %444 = vmatprep.subr.bf16.mxu0 0
    %445 = vmatpush2.bf16.msra.mxu0 %v405
    %446 = vmatprep.subr.bf16.mxu0 0
    %447 = vmatpush2.bf16.msra.mxu0 %v404
    %448 = vmatprep.subr.bf16.mxu0 0
    %449 = vmatpush2.bf16.msra.mxu0 %v403
    %450 = vmatprep.subr.bf16.mxu0 0
    %451 = vmatpush2.bf16.msra.mxu0 %v402
    %452 = vmatprep.subr.bf16.mxu0 0
    %453 = vmatpush2.bf16.msra.mxu0 %v401
    %454 = vmatprep.subr.bf16.mxu0 0
    %455 = vmatpush2.bf16.msra.mxu0 %v400
    %456 = vmatprep.mubr.bf16.mxu0 %v265
    %457 = vmatmul.mubr.bf16.gmra.mxu0 %v264
    %v458 = vpop.f32.mrf.mxu0
    %v459 = vadd.f32 0.0, %v458
    %v460 = vpop.f32.mrf.mxu0
    %v461 = vpop.f32.mrf.mxu0
    %v462 = vadd.f32 0.0, %v461
    %v463 = vpop.f32.mrf.mxu0
    %464 = vmatprep.mubr.bf16.mxu0 %v267
    %465 = vmatmul.mubr.bf16.gmra.mxu0 %v266
    %v466 = vpop.f32.mrf.mxu0
    %v467 = vadd.f32 0.0, %v466
    %v468 = vpop.f32.mrf.mxu0
    %v469 = vpop.f32.mrf.mxu0
    %v470 = vadd.f32 0.0, %v469
    %v471 = vpop.f32.mrf.mxu0
    %472 = vmatprep.mubr.bf16.mxu0 %v269
    %473 = vmatmul.mubr.bf16.gmra.mxu0 %v268
    %v474 = vpop.f32.mrf.mxu0
    %v475 = vadd.f32 0.0, %v474
    %v476 = vpop.f32.mrf.mxu0
    %v477 = vpop.f32.mrf.mxu0
    %v478 = vadd.f32 0.0, %v477
    %v479 = vpop.f32.mrf.mxu0
    %480 = vmatprep.mubr.bf16.mxu0 %v271
    %481 = vmatmul.mubr.bf16.gmra.mxu0 %v270
    %v482 = vpop.f32.mrf.mxu0
    %v483 = vadd.f32 0.0, %v482
    %v484 = vpop.f32.mrf.mxu0
    %v485 = vpop.f32.mrf.mxu0
    %v486 = vadd.f32 0.0, %v485
    %v487 = vpop.f32.mrf.mxu0
    %488 = vmatprep.mubr.bf16.mxu0 %v273
    %489 = vmatmul.mubr.bf16.gmra.mxu0 %v272
    %v490 = vpop.f32.mrf.mxu0
    %v491 = vadd.f32 0.0, %v490
    %v492 = vpop.f32.mrf.mxu0
    %v493 = vpop.f32.mrf.mxu0
    %v494 = vadd.f32 0.0, %v493
    %v495 = vpop.f32.mrf.mxu0
    %496 = vmatprep.mubr.bf16.mxu0 %v275
    %497 = vmatmul.mubr.bf16.gmra.mxu0 %v274
    %v498 = vpop.f32.mrf.mxu0
    %v499 = vadd.f32 0.0, %v498
    %v500 = vpop.f32.mrf.mxu0
    %v501 = vpop.f32.mrf.mxu0
    %v502 = vadd.f32 0.0, %v501
    %v503 = vpop.f32.mrf.mxu0
    %504 = vmatprep.mubr.bf16.mxu0 %v277
    %505 = vmatmul.mubr.bf16.gmra.mxu0 %v276
    %v506 = vpop.f32.mrf.mxu0
    %v507 = vadd.f32 0.0, %v506
    %v508 = vpop.f32.mrf.mxu0
    %v509 = vpop.f32.mrf.mxu0
    %v510 = vadd.f32 0.0, %v509
    %v511 = vpop.f32.mrf.mxu0
    %512 = vmatprep.mubr.bf16.mxu0 %v279
    %513 = vmatmul.mubr.bf16.gmra.mxu0 %v278
    %v514 = vpop.f32.mrf.mxu0
    %v515 = vadd.f32 0.0, %v514
    %v516 = vpop.f32.mrf.mxu0
    %v517 = vpop.f32.mrf.mxu0
    %v518 = vadd.f32 0.0, %v517
    %v519 = vpop.f32.mrf.mxu0
    %520 = vmatprep.mubr.bf16.mxu0 %v281
    %521 = vmatmul.mubr.bf16.gmra.mxu0 %v280
    %v522 = vpop.f32.mrf.mxu0
    %v523 = vadd.f32 0.0, %v522
    %v524 = vpop.f32.mrf.mxu0
    %v525 = vpop.f32.mrf.mxu0
    %v526 = vadd.f32 0.0, %v525
    %v527 = vpop.f32.mrf.mxu0
    %528 = vmatprep.mubr.bf16.mxu0 %v283
    %529 = vmatmul.mubr.bf16.gmra.mxu0 %v282
    %v530 = vpop.f32.mrf.mxu0
    %v531 = vadd.f32 0.0, %v530
    %v532 = vpop.f32.mrf.mxu0
    %v533 = vpop.f32.mrf.mxu0
    %v534 = vadd.f32 0.0, %v533
    %v535 = vpop.f32.mrf.mxu0
    %536 = vmatprep.mubr.bf16.mxu0 %v285
    %537 = vmatmul.mubr.bf16.gmra.mxu0 %v284
    %v538 = vpop.f32.mrf.mxu0
    %v539 = vadd.f32 0.0, %v538
    %v540 = vpop.f32.mrf.mxu0
    %v541 = vpop.f32.mrf.mxu0
    %v542 = vadd.f32 0.0, %v541
    %v543 = vpop.f32.mrf.mxu0
    %544 = vmatprep.mubr.bf16.mxu0 %v287
    %545 = vmatmul.mubr.bf16.gmra.mxu0 %v286
    %v546 = vpop.f32.mrf.mxu0
    %v547 = vadd.f32 0.0, %v546
    %v548 = vpop.f32.mrf.mxu0
    %v549 = vpop.f32.mrf.mxu0
    %v550 = vadd.f32 0.0, %v549
    %v551 = vpop.f32.mrf.mxu0
    %552 = vmatprep.mubr.bf16.mxu0 %v289
    %553 = vmatmul.mubr.bf16.gmra.mxu0 %v288
    %v554 = vpop.f32.mrf.mxu0
    %v555 = vadd.f32 0.0, %v554
    %v556 = vpop.f32.mrf.mxu0
    %v557 = vpop.f32.mrf.mxu0
    %v558 = vadd.f32 0.0, %v557
    %v559 = vpop.f32.mrf.mxu0
    %560 = vmatprep.mubr.bf16.mxu0 %v291
    %561 = vmatmul.mubr.bf16.gmra.mxu0 %v290
    %v562 = vpop.f32.mrf.mxu0
    %v563 = vadd.f32 0.0, %v562
    %v564 = vpop.f32.mrf.mxu0
    %v565 = vpop.f32.mrf.mxu0
    %v566 = vadd.f32 0.0, %v565
    %v567 = vpop.f32.mrf.mxu0
    %568 = vmatprep.mubr.bf16.mxu0 %v293
    %569 = vmatmul.mubr.bf16.gmra.mxu0 %v292
    %v570 = vpop.f32.mrf.mxu0
    %v571 = vadd.f32 0.0, %v570
    %v572 = vpop.f32.mrf.mxu0
    %v573 = vpop.f32.mrf.mxu0
    %v574 = vadd.f32 0.0, %v573
    %v575 = vpop.f32.mrf.mxu0
    %576 = vmatprep.mubr.bf16.mxu0 %v295
    %577 = vmatmul.mubr.bf16.gmra.mxu0 %v294
    %v578 = vpop.f32.mrf.mxu0
    %v579 = vadd.f32 0.0, %v578
    %v580 = vpop.f32.mrf.mxu0
    %v581 = vpop.f32.mrf.mxu0
    %v582 = vadd.f32 0.0, %v581
    %v583 = vpop.f32.mrf.mxu0
    %584 = vdwg.mxu0
    %v585 = vadd.f32 %v72, %v459
    %v586 = vadd.f32 %v73, %v462
    %v587 = vadd.f32 %v74, %v467
    %v588 = vadd.f32 %v75, %v470
    %v589 = vadd.f32 %v76, %v475
    %v590 = vadd.f32 %v77, %v478
    %v591 = vadd.f32 %v78, %v483
    %v592 = vadd.f32 %v79, %v486
    %v593 = vadd.f32 %v80, %v491
    %v594 = vadd.f32 %v81, %v494
    %v595 = vadd.f32 %v82, %v499
    %v596 = vadd.f32 %v83, %v502
    %v597 = vadd.f32 %v84, %v507
    %v598 = vadd.f32 %v85, %v510
    %v599 = vadd.f32 %v86, %v515
    %v600 = vadd.f32 %v87, %v518
    %v601 = vadd.f32 %v88, %v523
    %v602 = vadd.f32 %v89, %v526
    %v603 = vadd.f32 %v90, %v531
    %v604 = vadd.f32 %v91, %v534
    %v605 = vadd.f32 %v92, %v539
    %v606 = vadd.f32 %v93, %v542
    %v607 = vadd.f32 %v94, %v547
    %v608 = vadd.f32 %v95, %v550
    %v609 = vadd.f32 %v96, %v555
    %v610 = vadd.f32 %v97, %v558
    %v611 = vadd.f32 %v98, %v563
    %v612 = vadd.f32 %v99, %v566
    %v613 = vadd.f32 %v100, %v571
    %v614 = vadd.f32 %v101, %v574
    %v615 = vadd.f32 %v102, %v579
    %v616 = vadd.f32 %v103, %v582
    %617 = vst [vmem:[#allocation2] sm:$0xff] %v585
    %618 = vst [vmem:[#allocation2 + $0x8] sm:$0xff] %v586
    %619 = vst [vmem:[#allocation2 + $0x10] sm:$0xff] %v587
    %620 = vst [vmem:[#allocation2 + $0x18] sm:$0xff] %v588
    %621 = vst [vmem:[#allocation2 + $0x20] sm:$0xff] %v589
    %622 = vst [vmem:[#allocation2 + $0x28] sm:$0xff] %v590
    %623 = vst [vmem:[#allocation2 + $0x30] sm:$0xff] %v591
    %624 = vst [vmem:[#allocation2 + $0x38] sm:$0xff] %v592
    %625 = vst [vmem:[#allocation2 + $0x40] sm:$0xff] %v593
    %626 = vst [vmem:[#allocation2 + $0x48] sm:$0xff] %v594
    %627 = vst [vmem:[#allocation2 + $0x50] sm:$0xff] %v595
    %628 = vst [vmem:[#allocation2 + $0x58] sm:$0xff] %v596
    %629 = vst [vmem:[#allocation2 + $0x60] sm:$0xff] %v597
    %630 = vst [vmem:[#allocation2 + $0x68] sm:$0xff] %v598
    %631 = vst [vmem:[#allocation2 + $0x70] sm:$0xff] %v599
    %632 = vst [vmem:[#allocation2 + $0x78] sm:$0xff] %v600
    %633 = vst [vmem:[#allocation2 + $0x80] sm:$0xff] %v601
    %634 = vst [vmem:[#allocation2 + $0x88] sm:$0xff] %v602
    %635 = vst [vmem:[#allocation2 + $0x90] sm:$0xff] %v603
    %636 = vst [vmem:[#allocation2 + $0x98] sm:$0xff] %v604
    %637 = vst [vmem:[#allocation2 + $0xa0] sm:$0xff] %v605
    %638 = vst [vmem:[#allocation2 + $0xa8] sm:$0xff] %v606
    %639 = vst [vmem:[#allocation2 + $0xb0] sm:$0xff] %v607
    %640 = vst [vmem:[#allocation2 + $0xb8] sm:$0xff] %v608
    %641 = vst [vmem:[#allocation2 + $0xc0] sm:$0xff] %v609
    %642 = vst [vmem:[#allocation2 + $0xc8] sm:$0xff] %v610
    %643 = vst [vmem:[#allocation2 + $0xd0] sm:$0xff] %v611
    %644 = vst [vmem:[#allocation2 + $0xd8] sm:$0xff] %v612
    %645 = vst [vmem:[#allocation2 + $0xe0] sm:$0xff] %v613
    %646 = vst [vmem:[#allocation2 + $0xe8] sm:$0xff] %v614
    %647 = vst [vmem:[#allocation2 + $0xf0] sm:$0xff] %v615
    %648 = vst [vmem:[#allocation2 + $0xf8] sm:$0xff] %v616
    // Predicated region
    $region34: #{la_combined_up_source.1} parent=1 // pred_check
      %p649 = pneg %p36
    $region35: #{la_combined_up_source.1} parent=1 // pred_check_branch
      %651 = sbr.rel (%p649) target = $region37
    $region36: #{la_combined_up_source.1} parent=1 // pred_region
      %v652 = vld [vmem:[#allocation3] sm:$0x1]
      %v653 = vld [vmem:[#allocation3 + $0x1] sm:$0x1]
      %v654 = vld [vmem:[#allocation2] sm:$0xff]
      %v655 = vld [vmem:[#allocation2 + $0x8] sm:$0xff]
      %v656 = vld [vmem:[#allocation2 + $0x10] sm:$0xff]
      %v657 = vld [vmem:[#allocation2 + $0x18] sm:$0xff]
      %v658 = vld [vmem:[#allocation2 + $0x20] sm:$0xff]
      %v659 = vld [vmem:[#allocation2 + $0x28] sm:$0xff]
      %v660 = vld [vmem:[#allocation2 + $0x30] sm:$0xff]
      %v661 = vld [vmem:[#allocation2 + $0x38] sm:$0xff]
      %v662 = vld [vmem:[#allocation2 + $0x40] sm:$0xff]
      %v663 = vld [vmem:[#allocation2 + $0x48] sm:$0xff]
      %v664 = vld [vmem:[#allocation2 + $0x50] sm:$0xff]
      %v665 = vld [vmem:[#allocation2 + $0x58] sm:$0xff]
      %v666 = vld [vmem:[#allocation2 + $0x60] sm:$0xff]
      %v667 = vld [vmem:[#allocation2 + $0x68] sm:$0xff]
      %v668 = vld [vmem:[#allocation2 + $0x70] sm:$0xff]
      %v669 = vld [vmem:[#allocation2 + $0x78] sm:$0xff]
      %v670 = vld [vmem:[#allocation2 + $0x80] sm:$0xff]
      %v671 = vld [vmem:[#allocation2 + $0x88] sm:$0xff]
      %v672 = vld [vmem:[#allocation2 + $0x90] sm:$0xff]
      %v673 = vld [vmem:[#allocation2 + $0x98] sm:$0xff]
      %v674 = vld [vmem:[#allocation2 + $0xa0] sm:$0xff]
      %v675 = vld [vmem:[#allocation2 + $0xa8] sm:$0xff]
      %v676 = vld [vmem:[#allocation2 + $0xb0] sm:$0xff]
      %v677 = vld [vmem:[#allocation2 + $0xb8] sm:$0xff]
      %v678 = vld [vmem:[#allocation2 + $0xc0] sm:$0xff]
      %v679 = vld [vmem:[#allocation2 + $0xc8] sm:$0xff]
      %v680 = vld [vmem:[#allocation2 + $0xd0] sm:$0xff]
      %v681 = vld [vmem:[#allocation2 + $0xd8] sm:$0xff]
      %v682 = vld [vmem:[#allocation2 + $0xe0] sm:$0xff]
      %v683 = vld [vmem:[#allocation2 + $0xe8] sm:$0xff]
      %v684 = vld [vmem:[#allocation2 + $0xf0] sm:$0xff]
      %v685 = vld [vmem:[#allocation2 + $0xf8] sm:$0xff]
      %v686 = vlaneseq
      %v687 = vshrl.u32 %v686, 7
      %v688 = vsub.s32 0, %v687
      %v689 = vrot.slane %v652, %v688
      %v690 = vadd.f32 %v654, %v689
      %v691 = vadd.f32 %v655, %v689
      %v692 = vadd.f32 %v656, %v689
      %v693 = vadd.f32 %v657, %v689
      %v694 = vadd.f32 %v658, %v689
      %v695 = vadd.f32 %v659, %v689
      %v696 = vadd.f32 %v660, %v689
      %v697 = vadd.f32 %v661, %v689
      %v698 = vadd.f32 %v662, %v689
      %v699 = vadd.f32 %v663, %v689
      %v700 = vadd.f32 %v664, %v689
      %v701 = vadd.f32 %v665, %v689
      %v702 = vadd.f32 %v666, %v689
      %v703 = vadd.f32 %v667, %v689
      %v704 = vadd.f32 %v668, %v689
      %v705 = vadd.f32 %v669, %v689
      %v706 = vadd.f32 %v670, %v689
      %v707 = vadd.f32 %v671, %v689
      %v708 = vadd.f32 %v672, %v689
      %v709 = vadd.f32 %v673, %v689
      %v710 = vadd.f32 %v674, %v689
      %v711 = vadd.f32 %v675, %v689
      %v712 = vadd.f32 %v676, %v689
      %v713 = vadd.f32 %v677, %v689
      %v714 = vadd.f32 %v678, %v689
      %v715 = vadd.f32 %v679, %v689
      %v716 = vadd.f32 %v680, %v689
      %v717 = vadd.f32 %v681, %v689
      %v718 = vadd.f32 %v682, %v689
      %v719 = vadd.f32 %v683, %v689
      %v720 = vadd.f32 %v684, %v689
      %v721 = vadd.f32 %v685, %v689
      %v722 = vld [vmem:[%s2] sm:$0xff]
      %v723 = vld [vmem:[%s2 + $0x8] sm:$0xff]
      %v724 = vld [vmem:[%s2 + $0x10] sm:$0xff]
      %v725 = vld [vmem:[%s2 + $0x18] sm:$0xff]
      %v726 = vld [vmem:[%s2 + $0x20] sm:$0xff]
      %v727 = vld [vmem:[%s2 + $0x28] sm:$0xff]
      %v728 = vld [vmem:[%s2 + $0x30] sm:$0xff]
      %v729 = vld [vmem:[%s2 + $0x38] sm:$0xff]
      %v730 = vld [vmem:[%s2 + $0x40] sm:$0xff]
      %v731 = vld [vmem:[%s2 + $0x48] sm:$0xff]
      %v732 = vld [vmem:[%s2 + $0x50] sm:$0xff]
      %v733 = vld [vmem:[%s2 + $0x58] sm:$0xff]
      %v734 = vld [vmem:[%s2 + $0x60] sm:$0xff]
      %v735 = vld [vmem:[%s2 + $0x68] sm:$0xff]
      %v736 = vld [vmem:[%s2 + $0x70] sm:$0xff]
      %v737 = vld [vmem:[%s2 + $0x78] sm:$0xff]
      %v738 = vld [vmem:[%s2 + $0x80] sm:$0xff]
      %v739 = vld [vmem:[%s2 + $0x88] sm:$0xff]
      %v740 = vld [vmem:[%s2 + $0x90] sm:$0xff]
      %v741 = vld [vmem:[%s2 + $0x98] sm:$0xff]
      %v742 = vld [vmem:[%s2 + $0xa0] sm:$0xff]
      %v743 = vld [vmem:[%s2 + $0xa8] sm:$0xff]
      %v744 = vld [vmem:[%s2 + $0xb0] sm:$0xff]
      %v745 = vld [vmem:[%s2 + $0xb8] sm:$0xff]
      %v746 = vld [vmem:[%s2 + $0xc0] sm:$0xff]
      %v747 = vld [vmem:[%s2 + $0xc8] sm:$0xff]
      %v748 = vld [vmem:[%s2 + $0xd0] sm:$0xff]
      %v749 = vld [vmem:[%s2 + $0xd8] sm:$0xff]
      %v750 = vld [vmem:[%s2 + $0xe0] sm:$0xff]
      %v751 = vld [vmem:[%s2 + $0xe8] sm:$0xff]
      %v752 = vld [vmem:[%s2 + $0xf0] sm:$0xff]
      %v753 = vld [vmem:[%s2 + $0xf8] sm:$0xff]
      %v754 = vlaneseq
      %v755 = vshrl.u32 %v754, 7
      %v756 = vsub.s32 0, %v755
      %v757 = vrot.slane %v653, %v756
      %v758 = vmul.f32 %v757, %v722
      %v759 = vmul.f32 %v757, %v723
      %v760 = vmul.f32 %v757, %v724
      %v761 = vmul.f32 %v757, %v725
      %v762 = vmul.f32 %v757, %v726
      %v763 = vmul.f32 %v757, %v727
      %v764 = vmul.f32 %v757, %v728
      %v765 = vmul.f32 %v757, %v729
      %v766 = vmul.f32 %v757, %v730
      %v767 = vmul.f32 %v757, %v731
      %v768 = vmul.f32 %v757, %v732
      %v769 = vmul.f32 %v757, %v733
      %v770 = vmul.f32 %v757, %v734
      %v771 = vmul.f32 %v757, %v735
      %v772 = vmul.f32 %v757, %v736
      %v773 = vmul.f32 %v757, %v737
      %v774 = vmul.f32 %v757, %v738
      %v775 = vmul.f32 %v757, %v739
      %v776 = vmul.f32 %v757, %v740
      %v777 = vmul.f32 %v757, %v741
      %v778 = vmul.f32 %v757, %v742
      %v779 = vmul.f32 %v757, %v743
      %v780 = vmul.f32 %v757, %v744
      %v781 = vmul.f32 %v757, %v745
      %v782 = vmul.f32 %v757, %v746
      %v783 = vmul.f32 %v757, %v747
      %v784 = vmul.f32 %v757, %v748
      %v785 = vmul.f32 %v757, %v749
      %v786 = vmul.f32 %v757, %v750
      %v787 = vmul.f32 %v757, %v751
      %v788 = vmul.f32 %v757, %v752
      %v789 = vmul.f32 %v757, %v753
      %v790 = vadd.f32 %v690, %v758
      %v791 = vadd.f32 %v691, %v759
      %v792 = vadd.f32 %v692, %v760
      %v793 = vadd.f32 %v693, %v761
      %v794 = vadd.f32 %v694, %v762
      %v795 = vadd.f32 %v695, %v763
      %v796 = vadd.f32 %v696, %v764
      %v797 = vadd.f32 %v697, %v765
      %v798 = vadd.f32 %v698, %v766
      %v799 = vadd.f32 %v699, %v767
      %v800 = vadd.f32 %v700, %v768
      %v801 = vadd.f32 %v701, %v769
      %v802 = vadd.f32 %v702, %v770
      %v803 = vadd.f32 %v703, %v771
      %v804 = vadd.f32 %v704, %v772
      %v805 = vadd.f32 %v705, %v773
      %v806 = vadd.f32 %v706, %v774
      %v807 = vadd.f32 %v707, %v775
      %v808 = vadd.f32 %v708, %v776
      %v809 = vadd.f32 %v709, %v777
      %v810 = vadd.f32 %v710, %v778
      %v811 = vadd.f32 %v711, %v779
      %v812 = vadd.f32 %v712, %v780
      %v813 = vadd.f32 %v713, %v781
      %v814 = vadd.f32 %v714, %v782
      %v815 = vadd.f32 %v715, %v783
      %v816 = vadd.f32 %v716, %v784
      %v817 = vadd.f32 %v717, %v785
      %v818 = vadd.f32 %v718, %v786
      %v819 = vadd.f32 %v719, %v787
      %v820 = vadd.f32 %v720, %v788
      %v821 = vadd.f32 %v721, %v789
      %v822 = vld [vmem:[%s3] sm:$0xff]
      %v823 = vld [vmem:[%s3 + $0x8] sm:$0xff]
      %v824 = vld [vmem:[%s3 + $0x10] sm:$0xff]
      %v825 = vld [vmem:[%s3 + $0x18] sm:$0xff]
      %v826 = vld [vmem:[%s3 + $0x20] sm:$0xff]
      %v827 = vld [vmem:[%s3 + $0x28] sm:$0xff]
      %v828 = vld [vmem:[%s3 + $0x30] sm:$0xff]
      %v829 = vld [vmem:[%s3 + $0x38] sm:$0xff]
      %v830 = vld [vmem:[%s3 + $0x40] sm:$0xff]
      %v831 = vld [vmem:[%s3 + $0x48] sm:$0xff]
      %v832 = vld [vmem:[%s3 + $0x50] sm:$0xff]
      %v833 = vld [vmem:[%s3 + $0x58] sm:$0xff]
      %v834 = vld [vmem:[%s3 + $0x60] sm:$0xff]
      %v835 = vld [vmem:[%s3 + $0x68] sm:$0xff]
      %v836 = vld [vmem:[%s3 + $0x70] sm:$0xff]
      %v837 = vld [vmem:[%s3 + $0x78] sm:$0xff]
      %v838 = vld [vmem:[%s3 + $0x80] sm:$0xff]
      %v839 = vld [vmem:[%s3 + $0x88] sm:$0xff]
      %v840 = vld [vmem:[%s3 + $0x90] sm:$0xff]
      %v841 = vld [vmem:[%s3 + $0x98] sm:$0xff]
      %v842 = vld [vmem:[%s3 + $0xa0] sm:$0xff]
      %v843 = vld [vmem:[%s3 + $0xa8] sm:$0xff]
      %v844 = vld [vmem:[%s3 + $0xb0] sm:$0xff]
      %v845 = vld [vmem:[%s3 + $0xb8] sm:$0xff]
      %v846 = vld [vmem:[%s3 + $0xc0] sm:$0xff]
      %v847 = vld [vmem:[%s3 + $0xc8] sm:$0xff]
      %v848 = vld [vmem:[%s3 + $0xd0] sm:$0xff]
      %v849 = vld [vmem:[%s3 + $0xd8] sm:$0xff]
      %v850 = vld [vmem:[%s3 + $0xe0] sm:$0xff]
      %v851 = vld [vmem:[%s3 + $0xe8] sm:$0xff]
      %v852 = vld [vmem:[%s3 + $0xf0] sm:$0xff]
      %v853 = vld [vmem:[%s3 + $0xf8] sm:$0xff]
      %v854 = vadd.f32 %v790, %v822
      %v855 = vadd.f32 %v791, %v823
      %v856 = vadd.f32 %v792, %v824
      %v857 = vadd.f32 %v793, %v825
      %v858 = vadd.f32 %v794, %v826
      %v859 = vadd.f32 %v795, %v827
      %v860 = vadd.f32 %v796, %v828
      %v861 = vadd.f32 %v797, %v829
      %v862 = vadd.f32 %v798, %v830
      %v863 = vadd.f32 %v799, %v831
      %v864 = vadd.f32 %v800, %v832
      %v865 = vadd.f32 %v801, %v833
      %v866 = vadd.f32 %v802, %v834
      %v867 = vadd.f32 %v803, %v835
      %v868 = vadd.f32 %v804, %v836
      %v869 = vadd.f32 %v805, %v837
      %v870 = vadd.f32 %v806, %v838
      %v871 = vadd.f32 %v807, %v839
      %v872 = vadd.f32 %v808, %v840
      %v873 = vadd.f32 %v809, %v841
      %v874 = vadd.f32 %v810, %v842
      %v875 = vadd.f32 %v811, %v843
      %v876 = vadd.f32 %v812, %v844
      %v877 = vadd.f32 %v813, %v845
      %v878 = vadd.f32 %v814, %v846
      %v879 = vadd.f32 %v815, %v847
      %v880 = vadd.f32 %v816, %v848
      %v881 = vadd.f32 %v817, %v849
      %v882 = vadd.f32 %v818, %v850
      %v883 = vadd.f32 %v819, %v851
      %v884 = vadd.f32 %v820, %v852
      %v885 = vadd.f32 %v821, %v853
      %v886 = vld [vmem:[%s4] sm:$0xff]
      %v887 = vld [vmem:[%s4 + $0x8] sm:$0xff]
      %v888 = vld [vmem:[%s4 + $0x10] sm:$0xff]
      %v889 = vld [vmem:[%s4 + $0x18] sm:$0xff]
      %v890 = vld [vmem:[%s4 + $0x20] sm:$0xff]
      %v891 = vld [vmem:[%s4 + $0x28] sm:$0xff]
      %v892 = vld [vmem:[%s4 + $0x30] sm:$0xff]
      %v893 = vld [vmem:[%s4 + $0x38] sm:$0xff]
      %v894 = vld [vmem:[%s4 + $0x40] sm:$0xff]
      %v895 = vld [vmem:[%s4 + $0x48] sm:$0xff]
      %v896 = vld [vmem:[%s4 + $0x50] sm:$0xff]
      %v897 = vld [vmem:[%s4 + $0x58] sm:$0xff]
      %v898 = vld [vmem:[%s4 + $0x60] sm:$0xff]
      %v899 = vld [vmem:[%s4 + $0x68] sm:$0xff]
      %v900 = vld [vmem:[%s4 + $0x70] sm:$0xff]
      %v901 = vld [vmem:[%s4 + $0x78] sm:$0xff]
      %v902 = vld [vmem:[%s4 + $0x80] sm:$0xff]
      %v903 = vld [vmem:[%s4 + $0x88] sm:$0xff]
      %v904 = vld [vmem:[%s4 + $0x90] sm:$0xff]
      %v905 = vld [vmem:[%s4 + $0x98] sm:$0xff]
      %v906 = vld [vmem:[%s4 + $0xa0] sm:$0xff]
      %v907 = vld [vmem:[%s4 + $0xa8] sm:$0xff]
      %v908 = vld [vmem:[%s4 + $0xb0] sm:$0xff]
      %v909 = vld [vmem:[%s4 + $0xb8] sm:$0xff]
      %v910 = vld [vmem:[%s4 + $0xc0] sm:$0xff]
      %v911 = vld [vmem:[%s4 + $0xc8] sm:$0xff]
      %v912 = vld [vmem:[%s4 + $0xd0] sm:$0xff]
      %v913 = vld [vmem:[%s4 + $0xd8] sm:$0xff]
      %v914 = vld [vmem:[%s4 + $0xe0] sm:$0xff]
      %v915 = vld [vmem:[%s4 + $0xe8] sm:$0xff]
      %v916 = vld [vmem:[%s4 + $0xf0] sm:$0xff]
      %v917 = vld [vmem:[%s4 + $0xf8] sm:$0xff]
      %v918 = vtanh.pop %v854
      %v919 = vtanh.pop %v855
      %v920 = vtanh.pop %v856
      %v921 = vtanh.pop %v857
      %v922 = vtanh.pop %v858
      %v923 = vtanh.pop %v859
      %v924 = vtanh.pop %v860
      %v925 = vtanh.pop %v861
      %v926 = vtanh.pop %v862
      %v927 = vtanh.pop %v863
      %v928 = vtanh.pop %v864
      %v929 = vtanh.pop %v865
      %v930 = vtanh.pop %v866
      %v931 = vtanh.pop %v867
      %v932 = vtanh.pop %v868
      %v933 = vtanh.pop %v869
      %v934 = vtanh.pop %v870
      %v935 = vtanh.pop %v871
      %v936 = vtanh.pop %v872
      %v937 = vtanh.pop %v873
      %v938 = vtanh.pop %v874
      %v939 = vtanh.pop %v875
      %v940 = vtanh.pop %v876
      %v941 = vtanh.pop %v877
      %v942 = vtanh.pop %v878
      %v943 = vtanh.pop %v879
      %v944 = vtanh.pop %v880
      %v945 = vtanh.pop %v881
      %v946 = vtanh.pop %v882
      %v947 = vtanh.pop %v883
      %v948 = vtanh.pop %v884
      %v949 = vtanh.pop %v885
      %v950 = vadd.f32 %v886, %v918
      %v951 = vadd.f32 %v887, %v919
      %v952 = vadd.f32 %v888, %v920
      %v953 = vadd.f32 %v889, %v921
      %v954 = vadd.f32 %v890, %v922
      %v955 = vadd.f32 %v891, %v923
      %v956 = vadd.f32 %v892, %v924
      %v957 = vadd.f32 %v893, %v925
      %v958 = vadd.f32 %v894, %v926
      %v959 = vadd.f32 %v895, %v927
      %v960 = vadd.f32 %v896, %v928
      %v961 = vadd.f32 %v897, %v929
      %v962 = vadd.f32 %v898, %v930
      %v963 = vadd.f32 %v899, %v931
      %v964 = vadd.f32 %v900, %v932
      %v965 = vadd.f32 %v901, %v933
      %v966 = vadd.f32 %v902, %v934
      %v967 = vadd.f32 %v903, %v935
      %v968 = vadd.f32 %v904, %v936
      %v969 = vadd.f32 %v905, %v937
      %v970 = vadd.f32 %v906, %v938
      %v971 = vadd.f32 %v907, %v939
      %v972 = vadd.f32 %v908, %v940
      %v973 = vadd.f32 %v909, %v941
      %v974 = vadd.f32 %v910, %v942
      %v975 = vadd.f32 %v911, %v943
      %v976 = vadd.f32 %v912, %v944
      %v977 = vadd.f32 %v913, %v945
      %v978 = vadd.f32 %v914, %v946
      %v979 = vadd.f32 %v915, %v947
      %v980 = vadd.f32 %v916, %v948
      %v981 = vadd.f32 %v917, %v949
      %982 = vst [vmem:[%s6] sm:$0xff] %v950
      %983 = vst [vmem:[%s6 + $0x8] sm:$0xff] %v951
      %984 = vst [vmem:[%s6 + $0x10] sm:$0xff] %v952
      %985 = vst [vmem:[%s6 + $0x18] sm:$0xff] %v953
      %986 = vst [vmem:[%s6 + $0x20] sm:$0xff] %v954
      %987 = vst [vmem:[%s6 + $0x28] sm:$0xff] %v955
      %988 = vst [vmem:[%s6 + $0x30] sm:$0xff] %v956
      %989 = vst [vmem:[%s6 + $0x38] sm:$0xff] %v957
      %990 = vst [vmem:[%s6 + $0x40] sm:$0xff] %v958
      %991 = vst [vmem:[%s6 + $0x48] sm:$0xff] %v959
      %992 = vst [vmem:[%s6 + $0x50] sm:$0xff] %v960
      %993 = vst [vmem:[%s6 + $0x58] sm:$0xff] %v961
      %994 = vst [vmem:[%s6 + $0x60] sm:$0xff] %v962
      %995 = vst [vmem:[%s6 + $0x68] sm:$0xff] %v963
      %996 = vst [vmem:[%s6 + $0x70] sm:$0xff] %v964
      %997 = vst [vmem:[%s6 + $0x78] sm:$0xff] %v965
      %998 = vst [vmem:[%s6 + $0x80] sm:$0xff] %v966
      %999 = vst [vmem:[%s6 + $0x88] sm:$0xff] %v967
      %1000 = vst [vmem:[%s6 + $0x90] sm:$0xff] %v968
      %1001 = vst [vmem:[%s6 + $0x98] sm:$0xff] %v969
      %1002 = vst [vmem:[%s6 + $0xa0] sm:$0xff] %v970
      %1003 = vst [vmem:[%s6 + $0xa8] sm:$0xff] %v971
      %1004 = vst [vmem:[%s6 + $0xb0] sm:$0xff] %v972
      %1005 = vst [vmem:[%s6 + $0xb8] sm:$0xff] %v973
      %1006 = vst [vmem:[%s6 + $0xc0] sm:$0xff] %v974
      %1007 = vst [vmem:[%s6 + $0xc8] sm:$0xff] %v975
      %1008 = vst [vmem:[%s6 + $0xd0] sm:$0xff] %v976
      %1009 = vst [vmem:[%s6 + $0xd8] sm:$0xff] %v977
      %1010 = vst [vmem:[%s6 + $0xe0] sm:$0xff] %v978
      %1011 = vst [vmem:[%s6 + $0xe8] sm:$0xff] %v979
      %1012 = vst [vmem:[%s6 + $0xf0] sm:$0xff] %v980
      %1013 = vst [vmem:[%s6 + $0xf8] sm:$0xff] %v981
    $region37: #{la_combined_up_source.1} parent=1 // pred_fallthru
      _
    // Predicated region
    $region38: #{la_combined_up_source.1} parent=1 // pred_check
      _
    $region39: #{la_combined_up_source.1} parent=1 // pred_check_branch
      %1015 = sbr.rel (0) target = $region41
    $region40: #{la_combined_up_source.1} parent=1 // pred_region
      _
    $region41: #{la_combined_up_source.1} parent=1 // pred_fallthru
      _
    // Predicated region
    $region42: #{la_combined_up_source.1} parent=1 // pred_check
      _
    $region43: #{la_combined_up_source.1} parent=1 // pred_check_branch
      %1017 = sbr.rel (0) target = $region45
    $region44: #{la_combined_up_source.1} parent=1 // pred_region
      _
    $region45: #{la_combined_up_source.1} parent=1 // pred_fallthru
      _
    %1018 = vsyncpa [#allocation4], 1

</llo_original>
